<compile_context>
chip_gen: v7x
topology: tpu7x:2x2x1
jax: 0.10.0
libtpu: 0.0.40
codegen_flags: <defaults>
</compile_context>

<pallas_src>
import functools
import math

import jax
import jax.numpy as jnp
import numpy as np
from jax.experimental import pallas as pl
from jax.experimental.pallas import tpu as pltpu
from numpy.polynomial.hermite import hermgauss

SQRT_PI = math.sqrt(math.pi)


# ---------------------------------------------------------------------------
# One-time packing of all parameter / quadrature constants into a single
# lane-dense VMEM buffer (rows, Gp).  Row layout (Hp = H rounded up to 8):
#   [0    , Hp )   : U0  = u_j on the flattened (i,j) grid, replicated over sublanes
#   [Hp   , 2Hp)   : U1  = u_i, replicated over sublanes
#   [2Hp  , 3Hp)   : lanes [0,in_dim) = W^T, lane in_dim = b, zeros elsewhere
#   [3Hp  , 4Hp)   : lanes [0,out_dim) = v, zeros elsewhere
#   row 4Hp        : A   = (c_i*c_j)/pi  (grid quadrature weights, 0 in padding lanes)
#   row 4Hp+1      : M   = c_j/sqrt(pi) on the i==0 lanes (marginal weights for E[phi])
#   row 4Hp+2      : v0 padded with zeros
# ---------------------------------------------------------------------------
def pack_params(params):
    W = np.asarray(params["W"], np.float32)     # (in_dim, H)
    b = np.asarray(params["b"], np.float32)     # (H,)
    v = np.asarray(params["v"], np.float32)     # (H, out_dim)
    v0 = np.asarray(params["v0"], np.float32)   # (out_dim,)
    u = np.asarray(params["u"], np.float64)     # Gauss-Hermite nodes (already * sqrt(2))
    c = np.asarray(params["c"], np.float64)     # Gauss-Hermite weights

    deg = int(u.shape[0])
    in_dim, H = W.shape
    out_dim = int(v.shape[1])

    G = deg * deg
    Gp = max(128, ((G + 127) // 128) * 128)     # lane-padded grid size
    Hp = ((H + 7) // 8) * 8                     # sublane-padded hidden size
    assert out_dim <= Gp and (in_dim + 1) <= Gp
    NR = 4 * Hp + 8

    Ui, Uj = np.meshgrid(u, u, indexing="xy")   # Ui[i,j] = u[j], Uj[i,j] = u[i]
    Ci, Cj = np.meshgrid(c, c, indexing="xy")   # Ci[i,j] = c[j], Cj[i,j] = c[i]

    pk = np.zeros((NR, Gp), np.float32)
    pk[0:Hp, :G] = Ui.reshape(1, -1)                       # U0 replicated
    pk[Hp:2 * Hp, :G] = Uj.reshape(1, -1)                  # U1 replicated
    pk[2 * Hp:2 * Hp + H, :in_dim] = W.T                   # W^T
    pk[2 * Hp:2 * Hp + H, in_dim] = b                      # hidden bias
    pk[3 * Hp:3 * Hp + H, :out_dim] = v                    # output weights
    pk[4 * Hp, :G] = (Ci * Cj).reshape(-1) / np.pi         # C / pi
    pk[4 * Hp + 1, :deg] = c / SQRT_PI                     # marginal c / sqrt(pi)
    pk[4 * Hp + 2, :out_dim] = v0                          # output bias

    meta = dict(in_dim=in_dim, H=H, Hp=Hp, out_dim=out_dim, deg=deg, Gp=Gp)
    return jnp.asarray(pk), meta


# ---------------------------------------------------------------------------
# Pallas kernel: Gram-Schmidt + quadrature + output projection for ONE phi
# sample per grid step.  All VPU/XLU/EUP, no MXU.
# ---------------------------------------------------------------------------
def gslp_kernel(phi_ref,    # SMEM (B, in_dim+1): per-sample [phi_w..., phi_b]
                pk_ref,     # VMEM (4*Hp+8, Gp) : packed params (see pack_params)
                out_ref,    # VMEM (1, 1, Gp)
                *, in_dim, Hp):
    bidx = pl.program_id(0)

    # ---- ||phi_w||^2 on the scalar core (unrolled over in_dim) -------------
    rsq = phi_ref[bidx, 0] * phi_ref[bidx, 0]
    for i in range(1, in_dim):
        rsq = rsq + phi_ref[bidx, i] * phi_ref[bidx, i]
    phi_b = phi_ref[bidx, in_dim]

    rsq_v = jnp.full((1, 1), rsq, dtype=jnp.float32) + 1e-30   # guard phi_w == 0
    r_v = jnp.sqrt(rsq_v)                                      # (1,1)  r = ||phi_w||
    inv_r = 1.0 / r_v                                          # (1,1)

    # ---- packed row blocks --------------------------------------------------
    U0 = pk_ref[0:Hp, :]                       # (Hp,Gp)  u_j, pre-replicated
    U1 = pk_ref[Hp:2 * Hp, :]                  # (Hp,Gp)  u_i, pre-replicated
    u_row = pk_ref[0:1, :]                     # (1,Gp)
    vmat = pk_ref[3 * Hp:4 * Hp, :]            # (Hp,Gp)  v (zero-padded lanes/rows)
    bcol = pk_ref[2 * Hp:3 * Hp, in_dim:in_dim + 1]            # (Hp,1)  hidden bias
    a_row = pk_ref[4 * Hp:4 * Hp + 1, :]       # (1,Gp)   C/pi  (0 in padding lanes)
    m_row = pk_ref[4 * Hp + 1:4 * Hp + 2, :]   # (1,Gp)   c_j/sqrt(pi) on i==0 lanes
    v0row = pk_ref[4 * Hp + 2:4 * Hp + 3, :]   # (1,Gp)   v0 (zero-padded)

    # ---- 2-column Gram-Schmidt (positive diagonal) on the VPU ---------------
    # p0[h] = phi_w . W_col_h ; R0 = p0/r ; R1 = ||W_col_h - q1 (q1.W_col_h)||
    p0 = phi_ref[bidx, 0] * pk_ref[2 * Hp:3 * Hp, 0:1]
    for i in range(1, in_dim):
        p0 = p0 + phi_ref[bidx, i] * pk_ref[2 * Hp:3 * Hp, i:i + 1]
    R0 = p0 * inv_r                                            # (Hp,1)
    r1sq = None
    for i in range(in_dim):
        resid = pk_ref[2 * Hp:3 * Hp, i:i + 1] - (phi_ref[bidx, i] * inv_r) * R0
        sq = resid * resid
        r1sq = sq if r1sq is None else r1sq + sq
    R1 = jnp.sqrt(r1sq)                                        # (Hp,1)

    # ---- s on the quadrature grid (depends only on the u_j coordinate) ------
    s_row = jnp.tanh(u_row * r_v + phi_b)                      # (1,Gp) single EUP row
    wq = a_row * s_row                                         # (1,Gp)  C*s/pi
    phi_mean = jnp.sum(m_row * s_row, axis=-1, keepdims=True)  # (1,1)   sum(c*s)/sqrt(pi)

    # ---- hidden activations over the grid: K=2 contraction as VPU FMAs ------
    z = R0 * U0 + R1 * U1 + bcol                               # (Hp,Gp)
    S = jnp.tanh(z)                                            # (Hp,Gp) EUP
    out_h = jnp.sum(wq * S, axis=-1, keepdims=True)            # (Hp,1)  lane reduce

    # ---- output projection (sublane reduce) + bias ---------------------------
    y = jnp.sum(out_h * vmat, axis=0, keepdims=True)           # (1,Gp)
    out_ref[0] = y + v0row * phi_mean                          # lane-dense unmasked store


# ---------------------------------------------------------------------------
# Wrapper: one jitted call = concat scalars -> pallas_call -> slice.
# ---------------------------------------------------------------------------
@functools.partial(jax.jit, static_argnames=("in_dim", "Hp", "out_dim"))
def _gslp_call(phi_ws, phi_bs, pk, *, in_dim, Hp, out_dim):
    B = phi_ws.shape[0]
    NR, Gp = pk.shape
    phi = jnp.concatenate(
        [phi_ws.reshape(B, in_dim).astype(jnp.float32),
         phi_bs.reshape(B, 1).astype(jnp.float32)], axis=1)    # (B, in_dim+1)

    kernel = functools.partial(gslp_kernel, in_dim=in_dim, Hp=Hp)
    out = pl.pallas_call(
        kernel,
        out_shape=jax.ShapeDtypeStruct((B, 1, Gp), jnp.float32),
        grid=(B,),
        in_specs=[
            pl.BlockSpec(memory_space=pltpu.MemorySpace.SMEM),   # per-sample scalars
            pl.BlockSpec((NR, Gp), lambda i: (0, 0)),            # packed params, resident
        ],
        out_specs=pl.BlockSpec((1, 1, Gp), lambda i: (i, 0, 0)),
        compiler_params=pltpu.CompilerParams(
            dimension_semantics=("parallel",)),                  # v7x: shard B over 2 TCs
    )(phi, pk)
    return out[:, 0, :out_dim]


def gslp_forward(phi_w, phi_b, pk, meta):
    """Single SchwartzNeuron phi (as in the torch forward)."""
    phi_ws = jnp.reshape(phi_w, (1, meta["in_dim"]))
    phi_bs = jnp.reshape(phi_b, (1,))
    return _gslp_call(phi_ws, phi_bs, pk,
                      in_dim=meta["in_dim"], Hp=meta["Hp"], out_dim=meta["out_dim"])[0]


def gslp_forward_batched(phi_ws, phi_bs, pk, meta):
    """Many phi samples per pallas_call (amortizes launch cost)."""
    return _gslp_call(phi_ws, phi_bs, pk,
                      in_dim=meta["in_dim"], Hp=meta["Hp"], out_dim=meta["out_dim"])


# ---------------------------------------------------------------------------
# Pure-JAX reference (direct transcription of the torch forward) for checking
# ---------------------------------------------------------------------------
def gslp_forward_ref(phi_w, phi_b, params):
    W, b, v, v0 = params["W"], params["b"], params["v"], params["v0"]
    u, c = params["u"], params["c"]

    w_ext = phi_w * jnp.ones_like(W)
    A = jnp.stack([w_ext, W], axis=0)
    A = jnp.transpose(A, (2, 1, 0))
    _, Rq = jnp.linalg.qr(A)
    r = Rq[0, 0, 0]
    R = Rq[:, :, 1].T

    Ui, Uj = jnp.meshgrid(u, u, indexing="xy")
    U = jnp.stack([Ui, Uj], axis=-1)                     # (deg, deg, 2)
    Ci, Cj = jnp.meshgrid(c, c, indexing="xy")
    C = Ci * Cj

    s = jnp.tanh(u * r + phi_b)                          # (deg,)
    phi_mean = jnp.sum(c * s) / SQRT_PI
    S = jnp.tanh(U @ R + b)                              # (deg, deg, H)
    s_grid = jnp.ones_like(C) * s
    out = jnp.sum((C * s_grid)[:, :, None] * S, axis=(0, 1)) / jnp.pi
    return out @ v + v0 * phi_mean


if __name__ == "__main__":
    # Small shapes consistent with the module
    in_dim, hidden_dim, out_dim, deg = 4, 32, 8, 10

    key = jax.random.PRNGKey(0)
    k_v, k_v0, k_W, k_b, k_w, k_pb, k_bw, k_bb = jax.random.split(key, 8)

    u_np, c_np = hermgauss(deg)
    params = {
        "v": jax.random.normal(k_v, (hidden_dim, out_dim), jnp.float32),
        "v0": jax.random.normal(k_v0, (out_dim,), jnp.float32),
        "W": jax.random.normal(k_W, (in_dim, hidden_dim), jnp.float32),
        "b": jax.random.normal(k_b, (hidden_dim,), jnp.float32),
        "u": jnp.asarray(u_np * np.sqrt(2.0), jnp.float32),
        "c": jnp.asarray(c_np, jnp.float32),
    }
    pk, meta = pack_params(params)   # one-time packing (cached parameter buffer)

    # SchwartzNeuron phi: weight (in_dim, 1), scalar bias, tanh activation
    phi_w = jax.random.normal(k_w, (in_dim, 1), jnp.float32)
    phi_b = jax.random.normal(k_pb, (), jnp.float32)

    y = jax.block_until_ready(gslp_forward(phi_w, phi_b, pk, meta))
    y_ref = jax.block_until_ready(gslp_forward_ref(phi_w, phi_b, params))
    np.testing.assert_allclose(np.asarray(y), np.asarray(y_ref), rtol=1e-2, atol=1e-2)

    # Batched phis over a parallel grid axis (uses v7x's 2nd TensorCore)
    Bt = 4
    phi_ws = jax.random.normal(k_bw, (Bt, in_dim), jnp.float32)
    phi_bs = jax.random.normal(k_bb, (Bt,), jnp.float32)
    yb = jax.block_until_ready(gslp_forward_batched(phi_ws, phi_bs, pk, meta))
    yb_ref = jnp.stack([gslp_forward_ref(phi_ws[i].reshape(in_dim, 1), phi_bs[i], params)
                        for i in range(Bt)])
    np.testing.assert_allclose(np.asarray(yb), np.asarray(yb_ref), rtol=1e-2, atol=1e-2)

    print("KERNEL_OK")
</pallas_src>

<mosaic_0001>
module attributes {stable_mosaic.version = 11 : i64} {
  func.func @gslp_kernel(%arg0: i32, %arg1: memref<1x5xf32, #tpu.memory_space<smem>>, %arg2: memref<136x128xf32, #tpu.memory_space<vmem>>, %arg3: memref<1x1x128xf32, #tpu.memory_space<vmem>>) attributes {dimension_semantics = [#tpu.dimension_semantics<parallel>], iteration_bounds = array<i64: 1>, scalar_prefetch = 0 : i64, scratch_operands = 0 : i64, tpu.core_type = #tpu.core_type<tc>, window_params = [{transform_indices = @transform_0, window_bounds = array<i64: 1, 5>}, {pipeline_mode = #tpu.pipeline_mode<synchronous>, transform_indices = @transform_1, window_bounds = array<i64: 136, 128>}, {transform_indices = @transform_2, window_bounds = array<i64: 1, 1, 128>}]} {
    %0 = arith.index_cast %arg0 : i32 to index
    %c0 = arith.constant 0 : index
    %1 = memref.load %arg1[%0, %c0] : memref<1x5xf32, #tpu.memory_space<smem>>
    %2 = arith.index_cast %arg0 : i32 to index
    %c0_0 = arith.constant 0 : index
    %3 = memref.load %arg1[%2, %c0_0] : memref<1x5xf32, #tpu.memory_space<smem>>
    %4 = arith.mulf %1, %3 : f32
    %5 = arith.index_cast %arg0 : i32 to index
    %c1 = arith.constant 1 : index
    %6 = memref.load %arg1[%5, %c1] : memref<1x5xf32, #tpu.memory_space<smem>>
    %7 = arith.index_cast %arg0 : i32 to index
    %c1_1 = arith.constant 1 : index
    %8 = memref.load %arg1[%7, %c1_1] : memref<1x5xf32, #tpu.memory_space<smem>>
    %9 = arith.mulf %6, %8 : f32
    %10 = arith.addf %4, %9 : f32
    %11 = arith.index_cast %arg0 : i32 to index
    %c2 = arith.constant 2 : index
    %12 = memref.load %arg1[%11, %c2] : memref<1x5xf32, #tpu.memory_space<smem>>
    %13 = arith.index_cast %arg0 : i32 to index
    %c2_2 = arith.constant 2 : index
    %14 = memref.load %arg1[%13, %c2_2] : memref<1x5xf32, #tpu.memory_space<smem>>
    %15 = arith.mulf %12, %14 : f32
    %16 = arith.addf %10, %15 : f32
    %17 = arith.index_cast %arg0 : i32 to index
    %c3 = arith.constant 3 : index
    %18 = memref.load %arg1[%17, %c3] : memref<1x5xf32, #tpu.memory_space<smem>>
    %19 = arith.index_cast %arg0 : i32 to index
    %c3_3 = arith.constant 3 : index
    %20 = memref.load %arg1[%19, %c3_3] : memref<1x5xf32, #tpu.memory_space<smem>>
    %21 = arith.mulf %18, %20 : f32
    %22 = arith.addf %16, %21 : f32
    %23 = arith.index_cast %arg0 : i32 to index
    %c4 = arith.constant 4 : index
    %24 = memref.load %arg1[%23, %c4] : memref<1x5xf32, #tpu.memory_space<smem>>
    %25 = vector.broadcast %22 : f32 to vector<1x1xf32>
    %cst = arith.constant 1.000000e-30 : f32
    %26 = vector.broadcast %cst : f32 to vector<1x1xf32>
    %27 = arith.addf %25, %26 : vector<1x1xf32>
    %28 = math.sqrt %27 : vector<1x1xf32>
    %cst_4 = arith.constant 1.000000e+00 : f32
    %29 = vector.broadcast %cst_4 : f32 to vector<1x1xf32>
    %30 = arith.divf %29, %28 : vector<1x1xf32>
    %c0_5 = arith.constant 0 : index
    %c0_6 = arith.constant 0 : index
    %31 = vector.load %arg2[%c0_5, %c0_6] : memref<136x128xf32, #tpu.memory_space<vmem>>, vector<32x128xf32>
    %c32 = arith.constant 32 : index
    %c0_7 = arith.constant 0 : index
    %32 = vector.load %arg2[%c32, %c0_7] : memref<136x128xf32, #tpu.memory_space<vmem>>, vector<32x128xf32>
    %c0_8 = arith.constant 0 : index
    %c0_9 = arith.constant 0 : index
    %33 = vector.load %arg2[%c0_8, %c0_9] : memref<136x128xf32, #tpu.memory_space<vmem>>, vector<1x128xf32>
    %c96 = arith.constant 96 : index
    %c0_10 = arith.constant 0 : index
    %34 = vector.load %arg2[%c96, %c0_10] : memref<136x128xf32, #tpu.memory_space<vmem>>, vector<32x128xf32>
    %c64 = arith.constant 64 : index
    %c4_11 = arith.constant 4 : index
    %35 = vector.load %arg2[%c64, %c4_11] : memref<136x128xf32, #tpu.memory_space<vmem>>, vector<32x1xf32>
    %c128 = arith.constant 128 : index
    %c0_12 = arith.constant 0 : index
    %36 = vector.load %arg2[%c128, %c0_12] : memref<136x128xf32, #tpu.memory_space<vmem>>, vector<1x128xf32>
    %c129 = arith.constant 129 : index
    %c0_13 = arith.constant 0 : index
    %37 = vector.load %arg2[%c129, %c0_13] : memref<136x128xf32, #tpu.memory_space<vmem>>, vector<1x128xf32>
    %c130 = arith.constant 130 : index
    %c0_14 = arith.constant 0 : index
    %38 = vector.load %arg2[%c130, %c0_14] : memref<136x128xf32, #tpu.memory_space<vmem>>, vector<1x128xf32>
    %39 = arith.index_cast %arg0 : i32 to index
    %c0_15 = arith.constant 0 : index
    %40 = memref.load %arg1[%39, %c0_15] : memref<1x5xf32, #tpu.memory_space<smem>>
    %c64_16 = arith.constant 64 : index
    %c0_17 = arith.constant 0 : index
    %41 = vector.load %arg2[%c64_16, %c0_17] : memref<136x128xf32, #tpu.memory_space<vmem>>, vector<32x1xf32>
    %42 = vector.broadcast %40 : f32 to vector<32x1xf32>
    %43 = arith.mulf %42, %41 : vector<32x1xf32>
    %44 = arith.index_cast %arg0 : i32 to index
    %c1_18 = arith.constant 1 : index
    %45 = memref.load %arg1[%44, %c1_18] : memref<1x5xf32, #tpu.memory_space<smem>>
    %c64_19 = arith.constant 64 : index
    %c1_20 = arith.constant 1 : index
    %46 = vector.load %arg2[%c64_19, %c1_20] : memref<136x128xf32, #tpu.memory_space<vmem>>, vector<32x1xf32>
    %47 = vector.broadcast %45 : f32 to vector<32x1xf32>
    %48 = arith.mulf %47, %46 : vector<32x1xf32>
    %49 = arith.addf %43, %48 : vector<32x1xf32>
    %50 = arith.index_cast %arg0 : i32 to index
    %c2_21 = arith.constant 2 : index
    %51 = memref.load %arg1[%50, %c2_21] : memref<1x5xf32, #tpu.memory_space<smem>>
    %c64_22 = arith.constant 64 : index
    %c2_23 = arith.constant 2 : index
    %52 = vector.load %arg2[%c64_22, %c2_23] : memref<136x128xf32, #tpu.memory_space<vmem>>, vector<32x1xf32>
    %53 = vector.broadcast %51 : f32 to vector<32x1xf32>
    %54 = arith.mulf %53, %52 : vector<32x1xf32>
    %55 = arith.addf %49, %54 : vector<32x1xf32>
    %56 = arith.index_cast %arg0 : i32 to index
    %c3_24 = arith.constant 3 : index
    %57 = memref.load %arg1[%56, %c3_24] : memref<1x5xf32, #tpu.memory_space<smem>>
    %c64_25 = arith.constant 64 : index
    %c3_26 = arith.constant 3 : index
    %58 = vector.load %arg2[%c64_25, %c3_26] : memref<136x128xf32, #tpu.memory_space<vmem>>, vector<32x1xf32>
    %59 = vector.broadcast %57 : f32 to vector<32x1xf32>
    %60 = arith.mulf %59, %58 : vector<32x1xf32>
    %61 = arith.addf %55, %60 : vector<32x1xf32>
    %62 = vector.broadcast %30 : vector<1x1xf32> to vector<32x1xf32>
    %63 = arith.mulf %61, %62 : vector<32x1xf32>
    %c64_27 = arith.constant 64 : index
    %c0_28 = arith.constant 0 : index
    %64 = vector.load %arg2[%c64_27, %c0_28] : memref<136x128xf32, #tpu.memory_space<vmem>>, vector<32x1xf32>
    %65 = arith.index_cast %arg0 : i32 to index
    %c0_29 = arith.constant 0 : index
    %66 = memref.load %arg1[%65, %c0_29] : memref<1x5xf32, #tpu.memory_space<smem>>
    %67 = vector.broadcast %66 : f32 to vector<1x1xf32>
    %68 = arith.mulf %67, %30 : vector<1x1xf32>
    %69 = vector.broadcast %68 : vector<1x1xf32> to vector<32x1xf32>
    %70 = arith.mulf %69, %63 : vector<32x1xf32>
    %71 = arith.subf %64, %70 : vector<32x1xf32>
    %72 = arith.mulf %71, %71 : vector<32x1xf32>
    %c64_30 = arith.constant 64 : index
    %c1_31 = arith.constant 1 : index
    %73 = vector.load %arg2[%c64_30, %c1_31] : memref<136x128xf32, #tpu.memory_space<vmem>>, vector<32x1xf32>
    %74 = arith.index_cast %arg0 : i32 to index
    %c1_32 = arith.constant 1 : index
    %75 = memref.load %arg1[%74, %c1_32] : memref<1x5xf32, #tpu.memory_space<smem>>
    %76 = vector.broadcast %75 : f32 to vector<1x1xf32>
    %77 = arith.mulf %76, %30 : vector<1x1xf32>
    %78 = vector.broadcast %77 : vector<1x1xf32> to vector<32x1xf32>
    %79 = arith.mulf %78, %63 : vector<32x1xf32>
    %80 = arith.subf %73, %79 : vector<32x1xf32>
    %81 = arith.mulf %80, %80 : vector<32x1xf32>
    %82 = arith.addf %72, %81 : vector<32x1xf32>
    %c64_33 = arith.constant 64 : index
    %c2_34 = arith.constant 2 : index
    %83 = vector.load %arg2[%c64_33, %c2_34] : memref<136x128xf32, #tpu.memory_space<vmem>>, vector<32x1xf32>
    %84 = arith.index_cast %arg0 : i32 to index
    %c2_35 = arith.constant 2 : index
    %85 = memref.load %arg1[%84, %c2_35] : memref<1x5xf32, #tpu.memory_space<smem>>
    %86 = vector.broadcast %85 : f32 to vector<1x1xf32>
    %87 = arith.mulf %86, %30 : vector<1x1xf32>
    %88 = vector.broadcast %87 : vector<1x1xf32> to vector<32x1xf32>
    %89 = arith.mulf %88, %63 : vector<32x1xf32>
    %90 = arith.subf %83, %89 : vector<32x1xf32>
    %91 = arith.mulf %90, %90 : vector<32x1xf32>
    %92 = arith.addf %82, %91 : vector<32x1xf32>
    %c64_36 = arith.constant 64 : index
    %c3_37 = arith.constant 3 : index
    %93 = vector.load %arg2[%c64_36, %c3_37] : memref<136x128xf32, #tpu.memory_space<vmem>>, vector<32x1xf32>
    %94 = arith.index_cast %arg0 : i32 to index
    %c3_38 = arith.constant 3 : index
    %95 = memref.load %arg1[%94, %c3_38] : memref<1x5xf32, #tpu.memory_space<smem>>
    %96 = vector.broadcast %95 : f32 to vector<1x1xf32>
    %97 = arith.mulf %96, %30 : vector<1x1xf32>
    %98 = vector.broadcast %97 : vector<1x1xf32> to vector<32x1xf32>
    %99 = arith.mulf %98, %63 : vector<32x1xf32>
    %100 = arith.subf %93, %99 : vector<32x1xf32>
    %101 = arith.mulf %100, %100 : vector<32x1xf32>
    %102 = arith.addf %92, %101 : vector<32x1xf32>
    %103 = math.sqrt %102 : vector<32x1xf32>
    %104 = vector.broadcast %28 : vector<1x1xf32> to vector<1x128xf32>
    %105 = arith.mulf %33, %104 : vector<1x128xf32>
    %106 = vector.broadcast %24 : f32 to vector<1x128xf32>
    %107 = arith.addf %105, %106 : vector<1x128xf32>
    %108 = math.tanh %107 : vector<1x128xf32>
    %109 = arith.mulf %36, %108 : vector<1x128xf32>
    %110 = arith.mulf %37, %108 : vector<1x128xf32>
    %cst_39 = arith.constant dense<0.000000e+00> : vector<1xf32>
    %111 = vector.multi_reduction <add>, %110, %cst_39 [1] : vector<1x128xf32> to vector<1xf32>
    %112 = vector.shape_cast %111 : vector<1xf32> to vector<1x1xf32>
    %113 = vector.broadcast %63 : vector<32x1xf32> to vector<32x128xf32>
    %114 = arith.mulf %113, %31 : vector<32x128xf32>
    %115 = vector.broadcast %103 : vector<32x1xf32> to vector<32x128xf32>
    %116 = arith.mulf %115, %32 : vector<32x128xf32>
    %117 = arith.addf %114, %116 : vector<32x128xf32>
    %118 = vector.broadcast %35 : vector<32x1xf32> to vector<32x128xf32>
    %119 = arith.addf %117, %118 : vector<32x128xf32>
    %120 = math.tanh %119 : vector<32x128xf32>
    %121 = vector.broadcast %109 : vector<1x128xf32> to vector<32x128xf32>
    %122 = arith.mulf %121, %120 : vector<32x128xf32>
    %cst_40 = arith.constant dense<0.000000e+00> : vector<32xf32>
    %123 = vector.multi_reduction <add>, %122, %cst_40 [1] : vector<32x128xf32> to vector<32xf32>
    %124 = vector.shape_cast %123 : vector<32xf32> to vector<32x1xf32>
    %125 = vector.broadcast %124 : vector<32x1xf32> to vector<32x128xf32>
    %126 = arith.mulf %125, %34 : vector<32x128xf32>
    %cst_41 = arith.constant dense<0.000000e+00> : vector<128xf32>
    %127 = vector.multi_reduction <add>, %126, %cst_41 [0] : vector<32x128xf32> to vector<128xf32>
    %128 = vector.shape_cast %127 : vector<128xf32> to vector<1x128xf32>
    %129 = vector.broadcast %112 : vector<1x1xf32> to vector<1x128xf32>
    %130 = arith.mulf %38, %129 : vector<1x128xf32>
    %131 = arith.addf %128, %130 : vector<1x128xf32>
    %c0_42 = arith.constant 0 : index
    %c0_43 = arith.constant 0 : index
    %c0_44 = arith.constant 0 : index
    %132 = vector.load %arg3[%c0_42, %c0_43, %c0_44] : memref<1x1x128xf32, #tpu.memory_space<vmem>>, vector<1x1x128xf32>
    %133 = vector.shape_cast %132 : vector<1x1x128xf32> to vector<1x128xf32>
    %134 = vector.shape_cast %131 : vector<1x128xf32> to vector<1x1x128xf32>
    tpu.vector_store %arg3[%c0_42, %c0_43, %c0_44], %134 {strides = array<i32>} : memref<1x1x128xf32, #tpu.memory_space<vmem>>, vector<1x1x128xf32>,
    return
  }
  func.func @transform_0(%arg0: i32) -> (i32, i32) {
    %c0_i32 = arith.constant 0 : i32
    %c0_i32_0 = arith.constant 0 : i32
    %c0_i32_1 = arith.constant 0 : i32
    return %c0_i32, %c0_i32_0 : i32, i32
  }
  func.func @transform_1(%arg0: i32) -> (i32, i32) {
    %c0_i32 = arith.constant 0 : i32
    %c0_i32_0 = arith.constant 0 : i32
    %c0_i32_1 = arith.constant 0 : i32
    return %c0_i32, %c0_i32_0 : i32, i32
  }
  func.func @transform_2(%arg0: i32) -> (i32, i32, i32) {
    %c0_i32 = arith.constant 0 : i32
    %c0_i32_0 = arith.constant 0 : i32
    %c0_i32_1 = arith.constant 0 : i32
    return %arg0, %c0_i32, %c0_i32_0 : i32, i32, i32
  }
}

</mosaic_0001>

<llo_original>
// kernel: _gslp_call.1
$region0: #{_gslp_call.1}
  #allocation0 [shape = 'u32[]', space=smem, size = 0x4, offset = 0x4, fixed_abs, tag = 'smem constant byte address 0x4 - core index']
  #allocation1 [shape = 'u32[144,128]{1,0:T(1,128)}', space=vmem, size = 0x12000, scoped, tag = 'internal scratch']
  %s0 = inlined_call_operand.vmem [shape: f32[1,5], index: 0, kind: input, shape index: {}]
  %s1 = inlined_call_operand.hbm [shape: f32[136,128], index: 1, kind: input, shape index: {}]
  %s2 = inlined_call_operand.vmem [shape: f32[1,1,128], index: 2, kind: output, shape index: {}]
  %s3 = sld [smem:[#allocation0]]
  $region26: #{_gslp_call.1} parent=0
    _
  %s5 = ssub.s32 1, %s3
  %s6 = scalar_select 0, %s5, %s3
  $region1: #{_gslp_call.1} parent=0
    #allocation2 [shape = 'u8[512]{0}', space=smem, size = 0x200, scoped, tag = 'input window, operand 0, single buffered']
    #allocation3 [shape = 's32[1]{0}', space=sflag, size = 0x4, scoped, tag = 'scoped memory for _gslp_call.1']
    #allocation4 [shape = 's32[1]{0}', space=sflag, size = 0x4, scoped, tag = 'scoped memory for _gslp_call.1']
    #allocation5 [shape = 'u8[69632]{0}', space=vmem, size = 0x11000, scoped, tag = 'input window, operand 1, single buffered']
    %7 = vsyncpa [#allocation4], 0
    %8 = vsyncpa [#allocation3], 0
    // Predicated region
    $region2: #{_gslp_call.1} parent=1 // pred_check
      _
    $region3: #{_gslp_call.1} parent=1 // pred_check_branch
      %10 = sbr.rel (0) target = $region5
    $region4: #{_gslp_call.1} parent=1 // pred_region
      %s12 = ssub.s32 16, 16
      %13 = vsyncadd [#allocation4], %s12
      %s15 = sshll.u32 %s0, 4
      %s16 = int_to_ptr.vmem [resolvable:$true] %s15
      %18 = dma.vmem_to_smem %s16, 16, [#allocation2], [#allocation4]
    $region5: #{_gslp_call.1} parent=1 // pred_fallthru
      _
    // Predicated region
    $region6: #{_gslp_call.1} parent=1 // pred_check
      _
    $region7: #{_gslp_call.1} parent=1 // pred_check_branch
      %20 = sbr.rel (0) target = $region9
    $region8: #{_gslp_call.1} parent=1 // pred_region
      %s22 = ssub.s32 2176, 2176
      %23 = vsyncadd [#allocation3], %s22
      %s24 = sshll.u32 [#allocation5], 4
      %s25 = int_to_ptr.vmem [resolvable:$true] %s24
      %30 = dma.hbm_to_vmem [thread:$0]  %s1, 2176, %s25, [#allocation3], 128, 128, 8
    $region9: #{_gslp_call.1} parent=1 // pred_fallthru
      _
    // Predicated region
    $region10: #{_gslp_call.1} parent=1 // pred_check
      _
    $region11: #{_gslp_call.1} parent=1 // pred_check_branch
      %32 = sbr.rel (0) target = $region13
    $region12: #{_gslp_call.1} parent=1 // pred_region
      %33 = dma.done [#allocation4], 16
    $region13: #{_gslp_call.1} parent=1 // pred_fallthru
      _
    // Predicated region
    $region14: #{_gslp_call.1} parent=1 // pred_check
      _
    $region15: #{_gslp_call.1} parent=1 // pred_check_branch
      %35 = sbr.rel (0) target = $region17
    $region16: #{_gslp_call.1} parent=1 // pred_region
      %36 = dma.done [#allocation3], 2176
    $region17: #{_gslp_call.1} parent=1 // pred_fallthru
      _
    %37 = sfence
    %s38 = smul.u32 0, 128
    %s39 = sld [smem:[#allocation2 + %s38]]
    %s40 = smul.f32 %s39, %s39
    %s41 = sadd.s32 %s38, 1
    %s42 = sld [smem:[#allocation2 + %s41]]
    %s43 = smul.f32 %s42, %s42
    %s44 = sadd.f32 %s40, %s43
    %s45 = sadd.s32 %s38, 2
    %s46 = sld [smem:[#allocation2 + %s45]]
    %s47 = smul.f32 %s46, %s46
    %s48 = sadd.f32 %s44, %s47
    %s49 = sadd.s32 %s38, 3
    %s50 = sld [smem:[#allocation2 + %s49]]
    %s51 = smul.f32 %s50, %s50
    %s52 = sadd.f32 %s48, %s51
    %s53 = sadd.s32 %s38, 4
    %s54 = sld [smem:[#allocation2 + %s53]]
    %v55 = vstv %s52
    %v56 = vadd.f32 %v55, 1e-30
    %v57 = vrsqrt.pop %v56
    %v58 = vmul.f32 %v56, %v57
    %vm59 = vcmp.eq.f32.partialorder %v56, inf
    %v60 = vsel %vm59, %v56, %v58
    %vm61 = vcmp.eq.f32.partialorder %v56, 0.0
    %v62 = vand.u32 %v56, 2147483648
    %v63 = vsel %vm61, %v62, %v60
    %v64 = vrcp.pop %v63
    %v65 = vmul.f32 1.0, %v64
    %v66 = vld [vmem:[#allocation5] sm:$0xff]
    %v67 = vld [vmem:[#allocation5 + $0x8] sm:$0xff]
    %v68 = vld [vmem:[#allocation5 + $0x10] sm:$0xff]
    %v69 = vld [vmem:[#allocation5 + $0x18] sm:$0xff]
    %v70 = vld [vmem:[#allocation5 + $0x20] sm:$0xff]
    %v71 = vld [vmem:[#allocation5 + $0x28] sm:$0xff]
    %v72 = vld [vmem:[#allocation5 + $0x30] sm:$0xff]
    %v73 = vld [vmem:[#allocation5 + $0x38] sm:$0xff]
    %v74 = vld [vmem:[#allocation5] sm:$0x1]
    %v75 = vld [vmem:[#allocation5 + $0x60] sm:$0xff]
    %v76 = vld [vmem:[#allocation5 + $0x68] sm:$0xff]
    %v77 = vld [vmem:[#allocation5 + $0x70] sm:$0xff]
    %v78 = vld [vmem:[#allocation5 + $0x78] sm:$0xff]
    %v79 = vld [vmem:[#allocation5 + $0x40] sm:$0xff]
    %v80 = vld [vmem:[#allocation5 + $0x48] sm:$0xff]
    %v81 = vld [vmem:[#allocation5 + $0x50] sm:$0xff]
    %v82 = vld [vmem:[#allocation5 + $0x58] sm:$0xff]
    %v83 = vld [vmem:[#allocation5 + $0x80] sm:$0x1]
    %v84 = vld [vmem:[#allocation5 + $0x81] sm:$0x1]
    %v85 = vld [vmem:[#allocation5 + $0x82] sm:$0x1]
    %v86 = vstv %s39
    %v87 = vmul.f32 %v86, %v79
    %v88 = vmul.f32 %v86, %v80
    %v89 = vmul.f32 %v86, %v81
    %v90 = vmul.f32 %v86, %v82
    %v91 = vstv %s42
    %v92 = vmul.f32 %v91, %v79
    %v93 = vmul.f32 %v91, %v80
    %v94 = vmul.f32 %v91, %v81
    %v95 = vmul.f32 %v91, %v82
    %100 = vrot.lane.b32.xlu0 %v92, 127
    %v101 = vpop.permute.xlu0 %100
    %102 = vrot.lane.b32.xlu0 %v93, 127
    %v103 = vpop.permute.xlu0 %102
    %104 = vrot.lane.b32.xlu0 %v94, 127
    %v105 = vpop.permute.xlu0 %104
    %106 = vrot.lane.b32.xlu0 %v95, 127
    %v107 = vpop.permute.xlu0 %106
    %v112 = vadd.f32 %v87, %v101
    %v113 = vadd.f32 %v88, %v103
    %v114 = vadd.f32 %v89, %v105
    %v115 = vadd.f32 %v90, %v107
    %v116 = vstv %s46
    %v117 = vmul.f32 %v116, %v79
    %v118 = vmul.f32 %v116, %v80
    %v119 = vmul.f32 %v116, %v81
    %v120 = vmul.f32 %v116, %v82
    %125 = vrot.lane.b32.xlu0 %v117, 126
    %v126 = vpop.permute.xlu0 %125
    %127 = vrot.lane.b32.xlu0 %v118, 126
    %v128 = vpop.permute.xlu0 %127
    %129 = vrot.lane.b32.xlu0 %v119, 126
    %v130 = vpop.permute.xlu0 %129
    %131 = vrot.lane.b32.xlu0 %v120, 126
    %v132 = vpop.permute.xlu0 %131
    %v137 = vadd.f32 %v112, %v126
    %v138 = vadd.f32 %v113, %v128
    %v139 = vadd.f32 %v114, %v130
    %v140 = vadd.f32 %v115, %v132
    %v141 = vstv %s50
    %v142 = vmul.f32 %v141, %v79
    %v143 = vmul.f32 %v141, %v80
    %v144 = vmul.f32 %v141, %v81
    %v145 = vmul.f32 %v141, %v82
    %150 = vrot.lane.b32.xlu0 %v142, 125
    %v151 = vpop.permute.xlu0 %150
    %152 = vrot.lane.b32.xlu0 %v143, 125
    %v153 = vpop.permute.xlu0 %152
    %154 = vrot.lane.b32.xlu0 %v144, 125
    %v155 = vpop.permute.xlu0 %154
    %156 = vrot.lane.b32.xlu0 %v145, 125
    %v157 = vpop.permute.xlu0 %156
    %v162 = vadd.f32 %v137, %v151
    %v163 = vadd.f32 %v138, %v153
    %v164 = vadd.f32 %v139, %v155
    %v165 = vadd.f32 %v140, %v157
    %v166 = vmul.f32 %v162, %v65
    %v167 = vmul.f32 %v163, %v65
    %v168 = vmul.f32 %v164, %v65
    %v169 = vmul.f32 %v165, %v65
    %v170 = vmul.f32 %v86, %v65
    %v171 = vmul.f32 %v170, %v166
    %v172 = vmul.f32 %v170, %v167
    %v173 = vmul.f32 %v170, %v168
    %v174 = vmul.f32 %v170, %v169
    %v175 = vsub.f32 %v79, %v171
    %v176 = vsub.f32 %v80, %v172
    %v177 = vsub.f32 %v81, %v173
    %v178 = vsub.f32 %v82, %v174
    %v179 = vmul.f32 %v175, %v175
    %v180 = vmul.f32 %v176, %v176
    %v181 = vmul.f32 %v177, %v177
    %v182 = vmul.f32 %v178, %v178
    %v183 = vmul.f32 %v91, %v65
    %v184 = vmul.f32 %v183, %v166
    %v185 = vmul.f32 %v183, %v167
    %v186 = vmul.f32 %v183, %v168
    %v187 = vmul.f32 %v183, %v169
    %192 = vrot.lane.b32.xlu0 %v184, 1
    %v193 = vpop.permute.xlu0 %192
    %194 = vrot.lane.b32.xlu0 %v185, 1
    %v195 = vpop.permute.xlu0 %194
    %196 = vrot.lane.b32.xlu0 %v186, 1
    %v197 = vpop.permute.xlu0 %196
    %198 = vrot.lane.b32.xlu0 %v187, 1
    %v199 = vpop.permute.xlu0 %198
    %v204 = vsub.f32 %v79, %v193
    %v205 = vsub.f32 %v80, %v195
    %v206 = vsub.f32 %v81, %v197
    %v207 = vsub.f32 %v82, %v199
    %v208 = vmul.f32 %v204, %v204
    %v209 = vmul.f32 %v205, %v205
    %v210 = vmul.f32 %v206, %v206
    %v211 = vmul.f32 %v207, %v207
    %216 = vrot.lane.b32.xlu0 %v208, 127
    %v217 = vpop.permute.xlu0 %216
    %218 = vrot.lane.b32.xlu0 %v209, 127
    %v219 = vpop.permute.xlu0 %218
    %220 = vrot.lane.b32.xlu0 %v210, 127
    %v221 = vpop.permute.xlu0 %220
    %222 = vrot.lane.b32.xlu0 %v211, 127
    %v223 = vpop.permute.xlu0 %222
    %v228 = vadd.f32 %v179, %v217
    %v229 = vadd.f32 %v180, %v219
    %v230 = vadd.f32 %v181, %v221
    %v231 = vadd.f32 %v182, %v223
    %v232 = vmul.f32 %v116, %v65
    %v233 = vmul.f32 %v232, %v166
    %v234 = vmul.f32 %v232, %v167
    %v235 = vmul.f32 %v232, %v168
    %v236 = vmul.f32 %v232, %v169
    %241 = vrot.lane.b32.xlu0 %v233, 2
    %v242 = vpop.permute.xlu0 %241
    %243 = vrot.lane.b32.xlu0 %v234, 2
    %v244 = vpop.permute.xlu0 %243
    %245 = vrot.lane.b32.xlu0 %v235, 2
    %v246 = vpop.permute.xlu0 %245
    %247 = vrot.lane.b32.xlu0 %v236, 2
    %v248 = vpop.permute.xlu0 %247
    %v253 = vsub.f32 %v79, %v242
    %v254 = vsub.f32 %v80, %v244
    %v255 = vsub.f32 %v81, %v246
    %v256 = vsub.f32 %v82, %v248
    %v257 = vmul.f32 %v253, %v253
    %v258 = vmul.f32 %v254, %v254
    %v259 = vmul.f32 %v255, %v255
    %v260 = vmul.f32 %v256, %v256
    %265 = vrot.lane.b32.xlu0 %v257, 126
    %v266 = vpop.permute.xlu0 %265
    %267 = vrot.lane.b32.xlu0 %v258, 126
    %v268 = vpop.permute.xlu0 %267
    %269 = vrot.lane.b32.xlu0 %v259, 126
    %v270 = vpop.permute.xlu0 %269
    %271 = vrot.lane.b32.xlu0 %v260, 126
    %v272 = vpop.permute.xlu0 %271
    %v277 = vadd.f32 %v228, %v266
    %v278 = vadd.f32 %v229, %v268
    %v279 = vadd.f32 %v230, %v270
    %v280 = vadd.f32 %v231, %v272
    %v281 = vmul.f32 %v141, %v65
    %v282 = vmul.f32 %v281, %v166
    %v283 = vmul.f32 %v281, %v167
    %v284 = vmul.f32 %v281, %v168
    %v285 = vmul.f32 %v281, %v169
    %290 = vrot.lane.b32.xlu0 %v282, 3
    %v291 = vpop.permute.xlu0 %290
    %292 = vrot.lane.b32.xlu0 %v283, 3
    %v293 = vpop.permute.xlu0 %292
    %294 = vrot.lane.b32.xlu0 %v284, 3
    %v295 = vpop.permute.xlu0 %294
    %296 = vrot.lane.b32.xlu0 %v285, 3
    %v297 = vpop.permute.xlu0 %296
    %v302 = vsub.f32 %v79, %v291
    %v303 = vsub.f32 %v80, %v293
    %v304 = vsub.f32 %v81, %v295
    %v305 = vsub.f32 %v82, %v297
    %v306 = vmul.f32 %v302, %v302
    %v307 = vmul.f32 %v303, %v303
    %v308 = vmul.f32 %v304, %v304
    %v309 = vmul.f32 %v305, %v305
    %314 = vrot.lane.b32.xlu0 %v306, 125
    %v315 = vpop.permute.xlu0 %314
    %316 = vrot.lane.b32.xlu0 %v307, 125
    %v317 = vpop.permute.xlu0 %316
    %318 = vrot.lane.b32.xlu0 %v308, 125
    %v319 = vpop.permute.xlu0 %318
    %320 = vrot.lane.b32.xlu0 %v309, 125
    %v321 = vpop.permute.xlu0 %320
    %v326 = vadd.f32 %v277, %v315
    %v327 = vadd.f32 %v278, %v317
    %v328 = vadd.f32 %v279, %v319
    %v329 = vadd.f32 %v280, %v321
    %v330 = vrsqrt.pop %v326
    %v331 = vmul.f32 %v326, %v330
    %vm332 = vcmp.eq.f32.partialorder %v326, inf
    %v333 = vsel %vm332, %v326, %v331
    %vm334 = vcmp.eq.f32.partialorder %v326, 0.0
    %v335 = vand.u32 %v326, 2147483648
    %v336 = vsel %vm334, %v335, %v333
    %v337 = vrsqrt.pop %v327
    %v338 = vmul.f32 %v327, %v337
    %vm339 = vcmp.eq.f32.partialorder %v327, inf
    %v340 = vsel %vm339, %v327, %v338
    %vm341 = vcmp.eq.f32.partialorder %v327, 0.0
    %v342 = vand.u32 %v327, 2147483648
    %v343 = vsel %vm341, %v342, %v340
    %v344 = vrsqrt.pop %v328
    %v345 = vmul.f32 %v328, %v344
    %vm346 = vcmp.eq.f32.partialorder %v328, inf
    %v347 = vsel %vm346, %v328, %v345
    %vm348 = vcmp.eq.f32.partialorder %v328, 0.0
    %v349 = vand.u32 %v328, 2147483648
    %v350 = vsel %vm348, %v349, %v347
    %v351 = vrsqrt.pop %v329
    %v352 = vmul.f32 %v329, %v351
    %vm353 = vcmp.eq.f32.partialorder %v329, inf
    %v354 = vsel %vm353, %v329, %v352
    %vm355 = vcmp.eq.f32.partialorder %v329, 0.0
    %v356 = vand.u32 %v329, 2147483648
    %v357 = vsel %vm355, %v356, %v354
    %v358 = vmul.f32 %v74, %v63
    %v359 = vstv %s54
    %v360 = vadd.f32 %v358, %v359
    %v361 = vtanh.pop %v360
    %v362 = vmul.f32 %v83, %v361
    %v363 = vmul.f32 %v84, %v361
    %vm364 = vcmask 1040384
    %v365 = vsel %vm364, %v363, 0.0
    %366 = vadd.xlane.f32.xlu0 %v365
    %v367 = vpop.xlane.xlu0 %366
    %369 = vset.pattern.permute.xlu0 0
    %370 = vperm.xlu0 %369, %v166
    %v371 = vpop.permute.xlu0 %370
    %374 = vset.pattern.permute.xlu0 0
    %375 = vperm.xlu0 %374, %v167
    %v376 = vpop.permute.xlu0 %375
    %379 = vset.pattern.permute.xlu0 0
    %380 = vperm.xlu0 %379, %v168
    %v381 = vpop.permute.xlu0 %380
    %384 = vset.pattern.permute.xlu0 0
    %385 = vperm.xlu0 %384, %v169
    %v386 = vpop.permute.xlu0 %385
    %v388 = vmul.f32 %v371, %v66
    %v389 = vmul.f32 %v376, %v67
    %v390 = vmul.f32 %v381, %v68
    %v391 = vmul.f32 %v386, %v69
    %393 = vset.pattern.permute.xlu0 0
    %394 = vperm.xlu0 %393, %v336
    %v395 = vpop.permute.xlu0 %394
    %398 = vset.pattern.permute.xlu0 0
    %399 = vperm.xlu0 %398, %v343
    %v400 = vpop.permute.xlu0 %399
    %403 = vset.pattern.permute.xlu0 0
    %404 = vperm.xlu0 %403, %v350
    %v405 = vpop.permute.xlu0 %404
    %408 = vset.pattern.permute.xlu0 0
    %409 = vperm.xlu0 %408, %v357
    %v410 = vpop.permute.xlu0 %409
    %v412 = vmul.f32 %v395, %v70
    %v413 = vmul.f32 %v400, %v71
    %v414 = vmul.f32 %v405, %v72
    %v415 = vmul.f32 %v410, %v73
    %v416 = vadd.f32 %v388, %v412
    %v417 = vadd.f32 %v389, %v413
    %v418 = vadd.f32 %v390, %v414
    %v419 = vadd.f32 %v391, %v415
    %421 = vset.pattern.permute.xlu0 4
    %422 = vperm.xlu0 %421, %v79
    %v423 = vpop.permute.xlu0 %422
    %426 = vset.pattern.permute.xlu0 4
    %427 = vperm.xlu0 %426, %v80
    %v428 = vpop.permute.xlu0 %427
    %431 = vset.pattern.permute.xlu0 4
    %432 = vperm.xlu0 %431, %v81
    %v433 = vpop.permute.xlu0 %432
    %436 = vset.pattern.permute.xlu0 4
    %437 = vperm.xlu0 %436, %v82
    %v438 = vpop.permute.xlu0 %437
    %v440 = vadd.f32 %v416, %v423
    %v441 = vadd.f32 %v417, %v428
    %v442 = vadd.f32 %v418, %v433
    %v443 = vadd.f32 %v419, %v438
    %v444 = vtanh.pop %v440
    %v445 = vtanh.pop %v441
    %v446 = vtanh.pop %v442
    %v447 = vtanh.pop %v443
    %v448 = vlaneseq
    %v449 = vshrl.u32 %v448, 7
    %v450 = vsub.s32 0, %v449
    %v451 = vrot.slane %v362, %v450
    %v452 = vmul.f32 %v451, %v444
    %v453 = vmul.f32 %v451, %v445
    %v454 = vmul.f32 %v451, %v446
    %v455 = vmul.f32 %v451, %v447
    %456 = vadd.xlane.f32.xlu0 %v452
    %v457 = vpop.xlane.xlu0 %456
    %458 = vadd.xlane.f32.xlu0 %v453
    %v459 = vpop.xlane.xlu0 %458
    %460 = vadd.xlane.f32.xlu0 %v454
    %v461 = vpop.xlane.xlu0 %460
    %462 = vadd.xlane.f32.xlu0 %v455
    %v463 = vpop.xlane.xlu0 %462
    %v464 = vmul.f32 %v457, %v75
    %v465 = vmul.f32 %v459, %v76
    %v466 = vmul.f32 %v461, %v77
    %v467 = vmul.f32 %v463, %v78
    %v468 = vadd.f32 %v464, %v465
    %v469 = vadd.f32 %v468, %v466
    %v470 = vadd.f32 %v469, %v467
    %v471 = vrot.slane %v470, 4
    %v472 = vadd.f32 %v470, %v471
    %v473 = vrot.slane %v472, 2
    %v474 = vadd.f32 %v472, %v473
    %v475 = vrot.slane %v474, 1
    %v476 = vadd.f32 %v474, %v475
    %v477 = vmul.f32 %v85, %v367
    %v478 = vadd.f32 %v476, %v477
    %479 = vst [vmem:[%s2] sm:$0x1] %v478
    // Predicated region
    $region18: #{_gslp_call.1} parent=1 // pred_check
      _
    $region19: #{_gslp_call.1} parent=1 // pred_check_branch
      %481 = sbr.rel (0) target = $region21
    $region20: #{_gslp_call.1} parent=1 // pred_region
      _
    $region21: #{_gslp_call.1} parent=1 // pred_fallthru
      _
    // Predicated region
    $region22: #{_gslp_call.1} parent=1 // pred_check
      _
    $region23: #{_gslp_call.1} parent=1 // pred_check_branch
      %483 = sbr.rel (0) target = $region25
    $region24: #{_gslp_call.1} parent=1 // pred_region
      _
    $region25: #{_gslp_call.1} parent=1 // pred_fallthru
      _
    %484 = vsyncpa [#allocation3], 1
    %485 = vsyncpa [#allocation4], 1

</llo_original>
